<compile_context>
chip_gen: v6e
topology: v6e:2x2x1
jax: 0.10.0
libtpu: 0.0.40
codegen_flags: <defaults>
</compile_context>

<pallas_src>
import functools

import numpy as np
import jax
import jax.numpy as jnp
from jax.experimental import pallas as pl
from jax.experimental.pallas import tpu as pltpu


def _round_up(a, b):
    return -(-a // b) * b


def _vq_kernel(x_ref, bias_ref, *out_refs, n_real, inv_temp, emit_pt,
               need_row_mask):
    if emit_pt:
        hard_ref, pt_ref, ent_ref, k_ref, psum_p_ref, psum_h_ref = out_refs
    else:
        hard_ref, ent_ref, k_ref, psum_p_ref, psum_h_ref = out_refs
        pt_ref = None

    tm, fsz = x_ref.shape

    # masked logits via a broadcast additive bias row (0 valid / -1e30 masked):
    # replaces the iota + per-index compare/OR + where(-inf) construction.
    x = x_ref[...].astype(jnp.float32)
    masked = x + bias_ref[...]                      # (tm,fsz) + (1,fsz)

    # ---- argmax / one-hot (scatter_ equivalent), first-max tie-break ----
    col = jax.lax.broadcasted_iota(jnp.int32, (tm, fsz), 1)
    row_max = jnp.max(masked, axis=-1, keepdims=True)
    is_max = masked == row_max
    k = jnp.min(jnp.where(is_max, col, jnp.int32(fsz)), axis=-1, keepdims=True)
    hard_f = (col == k).astype(jnp.float32)

    # ---- softmax + entropy (logsumexp form). Finite -1e30 sentinel makes
    # exp underflow to exactly 0 at masked cols, so no 0*inf NaN guard needed.
    s = masked - row_max
    e = jnp.exp(s)
    sum_e = jnp.sum(e, axis=-1, keepdims=True)
    p = e * pl.reciprocal(sum_e, approx=True)       # EUP recip + VPU mul
    ent = jnp.log(sum_e) - jnp.sum(p * s, axis=-1, keepdims=True)

    hard_ref[...] = hard_f.astype(hard_ref.dtype)
    ent_ref[...] = ent
    k_ref[...] = k

    # ---- temperature softmax only for the training / hard=False path ----
    if emit_pt:
        if inv_temp == 1.0:
            pt = p
        else:
            # max(masked * inv_temp) == inv_temp * row_max (temp > 0): reuse s.
            et = jnp.exp(s * jnp.float32(inv_temp))
            pt = et * pl.reciprocal(jnp.sum(et, axis=-1, keepdims=True),
                                    approx=True)
        pt_ref[...] = pt.astype(pt_ref.dtype)

    # ---- per-block partial column sums (no cross-iteration state) ----
    if need_row_mask:
        i = pl.program_id(0)
        row = jax.lax.broadcasted_iota(jnp.int32, (tm, 1), 0) + i * tm
        rvalid = row < n_real
        # where() (not multiply) so garbage/NaN in OOB rows can't leak in.
        p_sum = jnp.sum(jnp.where(rvalid, p, 0.0), axis=0, keepdims=True)
        h_sum = jnp.sum(jnp.where(rvalid, hard_f, 0.0), axis=0, keepdims=True)
    else:
        p_sum = jnp.sum(p, axis=0, keepdims=True)
        h_sum = jnp.sum(hard_f, axis=0, keepdims=True)
    psum_p_ref[...] = p_sum.reshape(1, 1, fsz)
    psum_h_ref[...] = h_sum.reshape(1, 1, fsz)


def _vmem_limit_bytes():
    cap = 64 * 1024 * 1024
    try:
        info = pltpu.get_tpu_info()
        cap = int(getattr(info, "vmem_capacity_bytes", cap))
    except Exception:
        pass
    # ~48 MiB on v7x (64 MiB physical), ~96 MiB on v5e/v6e (128 MiB physical)
    return int(min(cap * 3 // 4, 100 * 1024 * 1024))


def _pick_row_tile(n, fsz, in_bytes, out_bytes, emit_pt, vmem_limit, row_tile):
    itemsize = min(in_bytes, out_bytes)
    align = max(8, 32 // max(1, itemsize))          # 8 for f32, 16 for bf16
    # double-buffered input + hard (+ pt) tiles plus ~7 live f32 in-kernel temps
    per_row = fsz * (2 * in_bytes + 2 * out_bytes
                     + (2 * out_bytes if emit_pt else 0) + 28) + 32
    budget = max(vmem_limit - (4 << 20), 1 << 20)
    cap = min(budget // per_row, int(row_tile))
    cap = min(cap, _round_up(max(1, -(-n // 2)), align))  # >=2 blocks (v7x megacore)
    cap = min(cap, _round_up(n, align))
    cap = max(align, (cap // align) * align)
    # prefer a tile that divides n so the valid-row mask is compiled away
    tm = None
    if n % align == 0:
        for cand in range(cap, align - 1, -align):
            if n % cand == 0:
                tm = cand
                break
        if tm is not None and tm * 4 < cap:         # reject absurdly small divisors
            tm = None
    if tm is None:
        tm = cap
    return tm, (n % tm) != 0


def simple_vq_forward(x, prob_msk=(0, 2, 3), temp=1.0, training=False,
                      use_gumbel=False, hard=True, ground_truth_perplexity=None,
                      produce_targets=True, time_first=True, row_tile=1024):
    """Forward pass of SimpleVectorQuantizer (values match the PyTorch module)."""
    if not time_first:
        x = jnp.swapaxes(x, 1, 2)
    bsz, tsz, fsz = x.shape
    n = bsz * tsz
    out_dtype = x.dtype

    if training and use_gumbel:
        # TODO(synk): gumbel-softmax sampling path not implemented in the kernel.
        raise NotImplementedError("gumbel-softmax path not implemented")

    # Forward value of hard_x + pt - stop_grad(pt) is hard_x, so pt is only
    # emitted for the training / hard=False configuration.
    emit_pt = bool(training and not use_gumbel and not hard)

    xf = x.reshape(n, fsz)                          # native dtype, no extra pass

    # additive column bias (0 valid / -1e30 for prob_msk): tiny (1, fsz) input
    bias_np = np.zeros((1, fsz), np.float32)
    for i in prob_msk:
        bias_np[0, int(i)] = -1e30
    bias = jnp.asarray(bias_np)

    in_bytes = jnp.dtype(x.dtype).itemsize
    out_bytes = jnp.dtype(out_dtype).itemsize
    vmem_limit = _vmem_limit_bytes()
    tm, need_row_mask = _pick_row_tile(n, fsz, in_bytes, out_bytes, emit_pt,
                                       vmem_limit, row_tile)
    num_blocks = -(-n // tm)

    kernel = functools.partial(
        _vq_kernel, n_real=int(n), inv_temp=1.0 / float(temp),
        emit_pt=emit_pt, need_row_mask=bool(need_row_mask))

    row_spec = pl.BlockSpec((tm, fsz), lambda i: (i, 0))
    bias_spec = pl.BlockSpec((1, fsz), lambda i: (0, 0))
    col1_spec = pl.BlockSpec((tm, 1), lambda i: (i, 0))
    psum_spec = pl.BlockSpec((1, 1, fsz), lambda i: (i, 0, 0))

    out_shapes = [jax.ShapeDtypeStruct((n, fsz), out_dtype)]      # hard one-hot
    out_specs = [row_spec]
    if emit_pt:
        out_shapes.append(jax.ShapeDtypeStruct((n, fsz), out_dtype))  # softmax(x/temp)
        out_specs.append(row_spec)
    out_shapes += [
        jax.ShapeDtypeStruct((n, 1), jnp.float32),                # per-row entropy
        jax.ShapeDtypeStruct((n, 1), jnp.int32),                  # argmax index
        jax.ShapeDtypeStruct((num_blocks, 1, fsz), jnp.float32),  # partial col-sum probs
        jax.ShapeDtypeStruct((num_blocks, 1, fsz), jnp.float32),  # partial col-sum hard
    ]
    out_specs += [col1_spec, col1_spec, psum_spec, psum_spec]

    outs = pl.pallas_call(
        kernel,
        out_shape=tuple(out_shapes),
        grid_spec=pltpu.PrefetchScalarGridSpec(
            num_scalar_prefetch=0,
            grid=(num_blocks,),
            in_specs=[row_spec, bias_spec],
            out_specs=out_specs,
        ),
        compiler_params=pltpu.CompilerParams(
            dimension_semantics=("parallel",),
            vmem_limit_bytes=int(vmem_limit),
        ),
    )(xf, bias)

    if emit_pt:
        hard_x, pt, ent_rows, k_rows, psum_probs, psum_hard = outs
    else:
        hard_x, ent_rows, k_rows, psum_probs, psum_hard = outs
        pt = None

    result = {"num_vars": fsz}
    nf = jnp.float32(n)

    # code perplexity from empirical one-hot usage
    hard_probs = jnp.sum(psum_hard, axis=(0, 1)) / nf
    result["code_perplexity"] = jnp.exp(
        -jnp.sum(hard_probs * jnp.log(hard_probs + 1e-7), axis=-1))

    # prob perplexity from average softmax
    avg_probs = jnp.sum(psum_probs, axis=(0, 1)) / nf
    result["prob_perplexity"] = jnp.exp(
        -jnp.sum(avg_probs * jnp.log(avg_probs + 1e-7), axis=-1))

    # entropy per timestep, averaged over batch (rows are ordered (b, t))
    result["ent_per_t"] = ent_rows[:, 0].reshape(bsz, tsz).mean(axis=0)  # (tsz,)

    result["temp"] = float(temp)

    # output probabilities (subword_prob) -- forward values only
    if training and not hard:
        sp = pt
    else:
        # eval, or training+hard=True (forward value of hard + pt - sg(pt))
        sp = hard_x
    result["subword_prob"] = sp.reshape(bsz, tsz, fsz)

    if ground_truth_perplexity is not None:
        result["diversity_loss"] = (
            (result["prob_perplexity"] - ground_truth_perplexity) ** 2
            / (fsz - ground_truth_perplexity) ** 2)
    else:
        result["diversity_loss"] = (fsz - result["prob_perplexity"]) / fsz

    if produce_targets:
        result["targets"] = k_rows.reshape(bsz, tsz, 1)

    return result


if __name__ == "__main__":
    key = jax.random.PRNGKey(0)
    bsz, tsz, fsz = 2, 8, 32          # batch, time, codebook size (num_vars)
    x = jax.random.normal(key, (bsz, tsz, fsz), dtype=jnp.float32)
    msk = (0, 2, 3)

    # ---- eval path ----
    result = simple_vq_forward(x, prob_msk=msk, temp=1.0, training=False)
    jax.block_until_ready(result)

    # pure-JAX reference (eval path)
    msk_arr = jnp.array(msk)
    xr = x.reshape(-1, fsz).at[:, msk_arr].set(-jnp.inf)
    k_exp = jnp.argmax(xr, axis=-1)
    hard_exp = jax.nn.one_hot(k_exp, fsz, dtype=jnp.float32)
    p_exp = jax.nn.softmax(xr, axis=-1)
    ent_exp = (-jnp.sum(p_exp * jnp.log(p_exp + 1e-9), axis=-1)
               ).reshape(bsz, tsz).mean(axis=0)
    avg_exp = p_exp.mean(axis=0)
    prob_perp_exp = jnp.exp(-jnp.sum(avg_exp * jnp.log(avg_exp + 1e-7)))
    hp_exp = hard_exp.mean(axis=0)
    code_perp_exp = jnp.exp(-jnp.sum(hp_exp * jnp.log(hp_exp + 1e-7)))

    sp = result["subword_prob"]
    assert sp.shape == (bsz, tsz, fsz)
    assert result["targets"].shape == (bsz, tsz, 1)
    assert result["ent_per_t"].shape == (tsz,)
    # one-hot rows match reference, masked columns never selected
    assert bool(jnp.allclose(sp.reshape(-1, fsz), hard_exp))
    assert bool(jnp.all(sp[..., msk_arr] == 0.0))
    assert bool(jnp.all(result["targets"].reshape(-1) == k_exp))
    # approx reciprocal on the softmax denominator -> slightly looser tolerances
    assert bool(jnp.allclose(result["ent_per_t"], ent_exp, rtol=2e-3, atol=2e-3))
    assert bool(jnp.allclose(result["prob_perplexity"], prob_perp_exp,
                             rtol=2e-3, atol=2e-3))
    assert bool(jnp.allclose(result["code_perplexity"], code_perp_exp,
                             rtol=1e-4, atol=1e-4))

    # ---- training (non-gumbel, hard=False) path: temperature softmax ----
    res_tr = simple_vq_forward(x, prob_msk=msk, temp=2.0, training=True,
                               hard=False)
    jax.block_until_ready(res_tr)
    pt_exp = jax.nn.softmax(xr / 2.0, axis=-1)
    assert res_tr["subword_prob"].shape == (bsz, tsz, fsz)
    assert bool(jnp.allclose(res_tr["subword_prob"].reshape(-1, fsz), pt_exp,
                             rtol=2e-3, atol=2e-3))

    print("KERNEL_OK")
</pallas_src>

<mosaic_0001>
module attributes {stable_mosaic.version = 11 : i64} {
  func.func @_vq_kernel(%arg0: i32, %arg1: memref<8x32xf32, #tpu.memory_space<vmem>>, %arg2: memref<1x32xf32, #tpu.memory_space<vmem>>, %arg3: memref<8x32xf32, #tpu.memory_space<vmem>>, %arg4: memref<8x1xf32, #tpu.memory_space<vmem>>, %arg5: memref<8x1xi32, #tpu.memory_space<vmem>>, %arg6: memref<1x1x32xf32, #tpu.memory_space<vmem>>, %arg7: memref<1x1x32xf32, #tpu.memory_space<vmem>>) attributes {dimension_semantics = [#tpu.dimension_semantics<parallel>], iteration_bounds = array<i64: 2>, scalar_prefetch = 0 : i64, scratch_operands = 0 : i64, tpu.core_type = #tpu.core_type<tc>, window_params = [{transform_indices = @transform_0, window_bounds = array<i64: 8, 32>}, {pipeline_mode = #tpu.pipeline_mode<synchronous>, transform_indices = @transform_1, window_bounds = array<i64: 1, 32>}, {transform_indices = @transform_2, window_bounds = array<i64: 8, 32>}, {transform_indices = @transform_3, window_bounds = array<i64: 8, 1>}, {transform_indices = @transform_4, window_bounds = array<i64: 8, 1>}, {transform_indices = @transform_5, window_bounds = array<i64: 1, 1, 32>}, {transform_indices = @transform_6, window_bounds = array<i64: 1, 1, 32>}]} {
    %c0 = arith.constant 0 : index
    %c0_0 = arith.constant 0 : index
    %0 = vector.load %arg1[%c0, %c0_0] : memref<8x32xf32, #tpu.memory_space<vmem>>, vector<8x32xf32>
    %c0_1 = arith.constant 0 : index
    %c0_2 = arith.constant 0 : index
    %1 = vector.load %arg2[%c0_1, %c0_2] : memref<1x32xf32, #tpu.memory_space<vmem>>, vector<1x32xf32>
    %2 = vector.broadcast %1 : vector<1x32xf32> to vector<8x32xf32>
    %3 = arith.addf %0, %2 : vector<8x32xf32>
    %4 = tpu.iota {dimensions = array<i32: 1>} : vector<8x32xi32>
    %cst = arith.constant dense<0xFF800000> : vector<8xf32>
    %5 = vector.multi_reduction <maximumf>, %3, %cst [1] : vector<8x32xf32> to vector<8xf32>
    %6 = vector.shape_cast %5 : vector<8xf32> to vector<8x1xf32>
    %7 = vector.broadcast %6 : vector<8x1xf32> to vector<8x32xf32>
    %8 = arith.cmpf oeq, %3, %7 : vector<8x32xf32>
    %c32_i32 = arith.constant 32 : i32
    %9 = vector.broadcast %c32_i32 : i32 to vector<8x32xi32>
    %10 = arith.select %8, %4, %9 : vector<8x32xi1>, vector<8x32xi32>
    %cst_3 = arith.constant dense<2147483647> : vector<8xi32>
    %11 = vector.multi_reduction <minsi>, %10, %cst_3 [1] : vector<8x32xi32> to vector<8xi32>
    %12 = vector.shape_cast %11 : vector<8xi32> to vector<8x1xi32>
    %13 = vector.broadcast %12 : vector<8x1xi32> to vector<8x32xi32>
    %14 = arith.cmpi eq, %4, %13 : vector<8x32xi32>
    %15 = arith.extui %14 : vector<8x32xi1> to vector<8x32xi32>
    %16 = arith.sitofp %15 : vector<8x32xi32> to vector<8x32xf32>
    %17 = vector.broadcast %6 : vector<8x1xf32> to vector<8x32xf32>
    %18 = arith.subf %3, %17 : vector<8x32xf32>
    %19 = math.exp %18 : vector<8x32xf32>
    %cst_4 = arith.constant dense<0.000000e+00> : vector<8xf32>
    %20 = vector.multi_reduction <add>, %19, %cst_4 [1] : vector<8x32xf32> to vector<8xf32>
    %21 = vector.shape_cast %20 : vector<8xf32> to vector<8x1xf32>
    %22 = tpu.reciprocal %21 {approx = true} : vector<8x1xf32> -> vector<8x1xf32>
    %23 = vector.broadcast %22 : vector<8x1xf32> to vector<8x32xf32>
    %24 = arith.mulf %19, %23 : vector<8x32xf32>
    %25 = math.log %21 : vector<8x1xf32>
    %26 = arith.mulf %24, %18 : vector<8x32xf32>
    %cst_5 = arith.constant dense<0.000000e+00> : vector<8xf32>
    %27 = vector.multi_reduction <add>, %26, %cst_5 [1] : vector<8x32xf32> to vector<8xf32>
    %28 = vector.shape_cast %27 : vector<8xf32> to vector<8x1xf32>
    %29 = arith.subf %25, %28 : vector<8x1xf32>
    %c0_6 = arith.constant 0 : index
    %c0_7 = arith.constant 0 : index
    %30 = vector.load %arg3[%c0_6, %c0_7] : memref<8x32xf32, #tpu.memory_space<vmem>>, vector<8x32xf32>
    tpu.vector_store %arg3[%c0_6, %c0_7], %16 {strides = array<i32>} : memref<8x32xf32, #tpu.memory_space<vmem>>, vector<8x32xf32>,
    %c0_8 = arith.constant 0 : index
    %c0_9 = arith.constant 0 : index
    %31 = vector.load %arg4[%c0_8, %c0_9] : memref<8x1xf32, #tpu.memory_space<vmem>>, vector<8x1xf32>
    tpu.vector_store %arg4[%c0_8, %c0_9], %29 {strides = array<i32>} : memref<8x1xf32, #tpu.memory_space<vmem>>, vector<8x1xf32>,
    %c0_10 = arith.constant 0 : index
    %c0_11 = arith.constant 0 : index
    %32 = vector.load %arg5[%c0_10, %c0_11] : memref<8x1xi32, #tpu.memory_space<vmem>>, vector<8x1xi32>
    tpu.vector_store %arg5[%c0_10, %c0_11], %12 {strides = array<i32>} : memref<8x1xi32, #tpu.memory_space<vmem>>, vector<8x1xi32>,
    %cst_12 = arith.constant dense<0.000000e+00> : vector<32xf32>
    %33 = vector.multi_reduction <add>, %24, %cst_12 [0] : vector<8x32xf32> to vector<32xf32>
    %34 = vector.shape_cast %33 : vector<32xf32> to vector<1x32xf32>
    %cst_13 = arith.constant dense<0.000000e+00> : vector<32xf32>
    %35 = vector.multi_reduction <add>, %16, %cst_13 [0] : vector<8x32xf32> to vector<32xf32>
    %36 = vector.shape_cast %35 : vector<32xf32> to vector<1x32xf32>
    %37 = vector.shape_cast %34 : vector<1x32xf32> to vector<1x1x32xf32>
    %c0_14 = arith.constant 0 : index
    %c0_15 = arith.constant 0 : index
    %c0_16 = arith.constant 0 : index
    %38 = vector.load %arg6[%c0_14, %c0_15, %c0_16] : memref<1x1x32xf32, #tpu.memory_space<vmem>>, vector<1x1x32xf32>
    tpu.vector_store %arg6[%c0_14, %c0_15, %c0_16], %37 {strides = array<i32>} : memref<1x1x32xf32, #tpu.memory_space<vmem>>, vector<1x1x32xf32>,
    %39 = vector.shape_cast %36 : vector<1x32xf32> to vector<1x1x32xf32>
    %c0_17 = arith.constant 0 : index
    %c0_18 = arith.constant 0 : index
    %c0_19 = arith.constant 0 : index
    %40 = vector.load %arg7[%c0_17, %c0_18, %c0_19] : memref<1x1x32xf32, #tpu.memory_space<vmem>>, vector<1x1x32xf32>
    tpu.vector_store %arg7[%c0_17, %c0_18, %c0_19], %39 {strides = array<i32>} : memref<1x1x32xf32, #tpu.memory_space<vmem>>, vector<1x1x32xf32>,
    return
  }
  func.func @transform_0(%arg0: i32) -> (i32, i32) {
    %c0_i32 = arith.constant 0 : i32
    %c0_i32_0 = arith.constant 0 : i32
    return %arg0, %c0_i32 : i32, i32
  }
  func.func @transform_1(%arg0: i32) -> (i32, i32) {
    %c0_i32 = arith.constant 0 : i32
    %c0_i32_0 = arith.constant 0 : i32
    %c0_i32_1 = arith.constant 0 : i32
    return %c0_i32, %c0_i32_0 : i32, i32
  }
  func.func @transform_2(%arg0: i32) -> (i32, i32) {
    %c0_i32 = arith.constant 0 : i32
    %c0_i32_0 = arith.constant 0 : i32
    return %arg0, %c0_i32 : i32, i32
  }
  func.func @transform_3(%arg0: i32) -> (i32, i32) {
    %c0_i32 = arith.constant 0 : i32
    %c0_i32_0 = arith.constant 0 : i32
    return %arg0, %c0_i32 : i32, i32
  }
  func.func @transform_4(%arg0: i32) -> (i32, i32) {
    %c0_i32 = arith.constant 0 : i32
    %c0_i32_0 = arith.constant 0 : i32
    return %arg0, %c0_i32 : i32, i32
  }
  func.func @transform_5(%arg0: i32) -> (i32, i32, i32) {
    %c0_i32 = arith.constant 0 : i32
    %c0_i32_0 = arith.constant 0 : i32
    %c0_i32_1 = arith.constant 0 : i32
    return %arg0, %c0_i32, %c0_i32_0 : i32, i32, i32
  }
  func.func @transform_6(%arg0: i32) -> (i32, i32, i32) {
    %c0_i32 = arith.constant 0 : i32
    %c0_i32_0 = arith.constant 0 : i32
    %c0_i32_1 = arith.constant 0 : i32
    return %arg0, %c0_i32, %c0_i32_0 : i32, i32, i32
  }
}

</mosaic_0001>

<llo_original>
// kernel: tpu_custom_call.1
$region0: #{tpu_custom_call.1}
  #allocation0 [shape = 'u32[]', space=smem, size = 0x4, offset = 0x4, fixed_abs, tag = 'smem constant byte address 0x4 - core index']
  #allocation1 [shape = 'u32[144,128]{1,0:T(1,128)}', space=vmem, size = 0x12000, scoped, tag = 'internal scratch']
  %s0 = inlined_call_operand.hbm [shape: f32[16,32], index: 0, kind: input, shape index: {}]
  %s1 = inlined_call_operand.vmem [shape: f32[1,32], index: 1, kind: input, shape index: {}]
  %s2 = inlined_call_operand.hbm [shape: f32[16,32], index: 2, kind: output, shape index: {0}]
  %s3 = inlined_call_operand.vmem [shape: f32[16,1], index: 3, kind: output, shape index: {1}]
  %s4 = inlined_call_operand.vmem [shape: s32[16,1], index: 4, kind: output, shape index: {2}]
  %s5 = inlined_call_operand.hbm [shape: f32[2,1,32], index: 5, kind: output, shape index: {3}]
  %s6 = inlined_call_operand.hbm [shape: f32[2,1,32], index: 6, kind: output, shape index: {4}]
  %7 = xla_tuple %s2, %s3, %s4, %s5, %s6
  %s8 = sld [smem:[#allocation0]]
  $region77: #{tpu_custom_call.1} parent=0
    _
  %s10 = ssub.s32 1, %s8
  %s11 = scalar_select 0, %s10, %s8
  $region1: #{tpu_custom_call.1} parent=0
    #allocation2 [shape = 'u8[8192]{0}', space=vmem, size = 0x2000, scoped, tag = 'input window, operand 0']
    #allocation3 [shape = 's32[2]{0}', space=sflag, size = 0x8, scoped, tag = 'scoped memory for tpu_custom_call.1']
    #allocation4 [shape = 's32[2]{0}', space=sflag, size = 0x8, scoped, tag = 'scoped memory for tpu_custom_call.1']
    #allocation5 [shape = 'u8[8192]{0}', space=vmem, size = 0x2000, scoped, tag = 'output window, operand 0']
    #allocation6 [shape = 'u8[1024]{0}', space=vmem, size = 0x400, scoped, tag = 'output window, operand 3']
    #allocation7 [shape = 's32[2]{0}', space=sflag, size = 0x8, scoped, tag = 'scoped memory for tpu_custom_call.1']
    #allocation8 [shape = 'u8[1024]{0}', space=vmem, size = 0x400, scoped, tag = 'output window, operand 4']
    %12 = vsyncpa [#allocation3], 0
    %s13 = scalar_lea.sflag [#allocation3], 1
    %14 = vsyncpa %s13, 0
    %15 = vsyncpa [#allocation4], 0
    %s16 = scalar_lea.sflag [#allocation4], 1
    %17 = vsyncpa %s16, 0
    %18 = vsyncpa [#allocation7], 0
    %s19 = scalar_lea.sflag [#allocation7], 1
    %20 = vsyncpa %s19, 0
    loop: start=0, step=1, limit=4
    $region2: #{tpu_custom_call.1} parent=1 // loop_pre_header
      _
    $region3: #{tpu_custom_call.1} parent=1 // loop_header
      %s22 = sphi 0, %s26
      %p23 = scmp.ge.s32.totalorder %s22, 4
      %s32 = sphi 0, %s34
      %s35 = sphi 0, %s32
      %s36 = sphi 0, %s35
      %s52 = sphi 0, %s36
      %s56 = sphi 0, %s56
      %s58 = sphi 0, %s56
      %s59 = sphi 0, %s58
      %s73 = sphi 0, %s59
      %s79 = sphi 0, %s81
      %s82 = sphi 0, %s79
      %s83 = sphi 0, %s82
      %s99 = sphi 0, %s83
      %s105 = sphi 0, %s107
      %s108 = sphi 0, %s105
      %s109 = sphi 0, %s108
      %s125 = sphi 0, %s109
      %s131 = sphi 0, %s133
      %s134 = sphi 0, %s131
      %s135 = sphi 0, %s134
      %s151 = sphi 0, %s135
      %s157 = sphi 0, %s159
      %s160 = sphi 0, %s157
      %s161 = sphi 0, %s160
      %s177 = sphi 0, %s161
      %s183 = sphi 0, %s185
      %s186 = sphi 0, %s183
      %s187 = sphi 0, %s186
      %s203 = sphi 0, %s187
    $region4: #{tpu_custom_call.1} parent=1 // loop_header_branch
      %25 = sbr.rel (%p23) target = $region8
    $region5: #{tpu_custom_call.1} parent=1 // loop_body
      %s27 = ssub.s32 %s22, 1
      %s28 = ssub.s32 %s22, 2
      %s29 = sadd.s32 %s22, 1
      %s30 = ssub.s32 %s22, %s29
      %p31 = scmp.eq.s32.totalorder %s30, 0
      %s33 = sadd.s32 %s32, 1
      %s34 = scalar_select %p31, %s32, %s33
      %p37 = pneg %p31
      %p38 = scmp.eq.s32.totalorder %s22, 1
      %p39 = por %p37, %p38
      %p40 = scmp.ne.s32.totalorder %s32, %s35
      %p41 = scmp.eq.s32.totalorder %s22, 0
      %p42 = por %p40, %p41
      %p43 = scmp.ne.s32.totalorder %s32, %s35
      %p44 = scmp.eq.s32.totalorder %s27, 1
      %p45 = por %p43, %p44
      %p46 = scmp.ne.s32.totalorder %s35, %s36
      %p47 = scmp.eq.s32.totalorder %s27, 0
      %p48 = por %p46, %p47
      %p49 = scmp.ne.s32.totalorder %s35, %s36
      %p50 = scmp.eq.s32.totalorder %s28, 1
      %p51 = por %p49, %p50
      %p53 = scmp.ne.s32.totalorder %s36, %s52
      %p54 = scmp.eq.s32.totalorder %s28, 0
      %p55 = por %p53, %p54
      %s57 = sadd.s32 %s56, 1
      %p60 = scmp.eq.s32.totalorder %s22, 1
      %p61 = scmp.ne.s32.totalorder %s56, %s58
      %p62 = scmp.eq.s32.totalorder %s22, 0
      %p63 = por %p61, %p62
      %p64 = scmp.ne.s32.totalorder %s56, %s58
      %p65 = scmp.eq.s32.totalorder %s27, 1
      %p66 = por %p64, %p65
      %p67 = scmp.ne.s32.totalorder %s58, %s59
      %p68 = scmp.eq.s32.totalorder %s27, 0
      %p69 = por %p67, %p68
      %p70 = scmp.ne.s32.totalorder %s58, %s59
      %p71 = scmp.eq.s32.totalorder %s28, 1
      %p72 = por %p70, %p71
      %p74 = scmp.ne.s32.totalorder %s59, %s73
      %p75 = scmp.eq.s32.totalorder %s28, 0
      %p76 = por %p74, %p75
      %s77 = ssub.s32 %s22, %s29
      %p78 = scmp.eq.s32.totalorder %s77, 0
      %s80 = sadd.s32 %s79, 1
      %s81 = scalar_select %p78, %s79, %s80
      %p84 = pneg %p78
      %p85 = scmp.eq.s32.totalorder %s22, 1
      %p86 = por %p84, %p85
      %p87 = scmp.ne.s32.totalorder %s79, %s82
      %p88 = scmp.eq.s32.totalorder %s22, 0
      %p89 = por %p87, %p88
      %p90 = scmp.ne.s32.totalorder %s79, %s82
      %p91 = scmp.eq.s32.totalorder %s27, 1
      %p92 = por %p90, %p91
      %p93 = scmp.ne.s32.totalorder %s82, %s83
      %p94 = scmp.eq.s32.totalorder %s27, 0
      %p95 = por %p93, %p94
      %p96 = scmp.ne.s32.totalorder %s82, %s83
      %p97 = scmp.eq.s32.totalorder %s28, 1
      %p98 = por %p96, %p97
      %p100 = scmp.ne.s32.totalorder %s83, %s99
      %p101 = scmp.eq.s32.totalorder %s28, 0
      %p102 = por %p100, %p101
      %s103 = ssub.s32 %s22, %s29
      %p104 = scmp.eq.s32.totalorder %s103, 0
      %s106 = sadd.s32 %s105, 1
      %s107 = scalar_select %p104, %s105, %s106
      %p110 = pneg %p104
      %p111 = scmp.eq.s32.totalorder %s22, 1
      %p112 = por %p110, %p111
      %p113 = scmp.ne.s32.totalorder %s105, %s108
      %p114 = scmp.eq.s32.totalorder %s22, 0
      %p115 = por %p113, %p114
      %p116 = scmp.ne.s32.totalorder %s105, %s108
      %p117 = scmp.eq.s32.totalorder %s27, 1
      %p118 = por %p116, %p117
      %p119 = scmp.ne.s32.totalorder %s108, %s109
      %p120 = scmp.eq.s32.totalorder %s27, 0
      %p121 = por %p119, %p120
      %p122 = scmp.ne.s32.totalorder %s108, %s109
      %p123 = scmp.eq.s32.totalorder %s28, 1
      %p124 = por %p122, %p123
      %p126 = scmp.ne.s32.totalorder %s109, %s125
      %p127 = scmp.eq.s32.totalorder %s28, 0
      %p128 = por %p126, %p127
      %s129 = ssub.s32 %s22, %s29
      %p130 = scmp.eq.s32.totalorder %s129, 0
      %s132 = sadd.s32 %s131, 1
      %s133 = scalar_select %p130, %s131, %s132
      %p136 = pneg %p130
      %p137 = scmp.eq.s32.totalorder %s22, 1
      %p138 = por %p136, %p137
      %p139 = scmp.ne.s32.totalorder %s131, %s134
      %p140 = scmp.eq.s32.totalorder %s22, 0
      %p141 = por %p139, %p140
      %p142 = scmp.ne.s32.totalorder %s131, %s134
      %p143 = scmp.eq.s32.totalorder %s27, 1
      %p144 = por %p142, %p143
      %p145 = scmp.ne.s32.totalorder %s134, %s135
      %p146 = scmp.eq.s32.totalorder %s27, 0
      %p147 = por %p145, %p146
      %p148 = scmp.ne.s32.totalorder %s134, %s135
      %p149 = scmp.eq.s32.totalorder %s28, 1
      %p150 = por %p148, %p149
      %p152 = scmp.ne.s32.totalorder %s135, %s151
      %p153 = scmp.eq.s32.totalorder %s28, 0
      %p154 = por %p152, %p153
      %s155 = ssub.s32 %s22, %s29
      %p156 = scmp.eq.s32.totalorder %s155, 0
      %s158 = sadd.s32 %s157, 1
      %s159 = scalar_select %p156, %s157, %s158
      %p162 = pneg %p156
      %p163 = scmp.eq.s32.totalorder %s22, 1
      %p164 = por %p162, %p163
      %p165 = scmp.ne.s32.totalorder %s157, %s160
      %p166 = scmp.eq.s32.totalorder %s22, 0
      %p167 = por %p165, %p166
      %p168 = scmp.ne.s32.totalorder %s157, %s160
      %p169 = scmp.eq.s32.totalorder %s27, 1
      %p170 = por %p168, %p169
      %p171 = scmp.ne.s32.totalorder %s160, %s161
      %p172 = scmp.eq.s32.totalorder %s27, 0
      %p173 = por %p171, %p172
      %p174 = scmp.ne.s32.totalorder %s160, %s161
      %p175 = scmp.eq.s32.totalorder %s28, 1
      %p176 = por %p174, %p175
      %p178 = scmp.ne.s32.totalorder %s161, %s177
      %p179 = scmp.eq.s32.totalorder %s28, 0
      %p180 = por %p178, %p179
      %s181 = ssub.s32 %s22, %s29
      %p182 = scmp.eq.s32.totalorder %s181, 0
      %s184 = sadd.s32 %s183, 1
      %s185 = scalar_select %p182, %s183, %s184
      %p188 = pneg %p182
      %p189 = scmp.eq.s32.totalorder %s22, 1
      %p190 = por %p188, %p189
      %p191 = scmp.ne.s32.totalorder %s183, %s186
      %p192 = scmp.eq.s32.totalorder %s22, 0
      %p193 = por %p191, %p192
      %p194 = scmp.ne.s32.totalorder %s183, %s186
      %p195 = scmp.eq.s32.totalorder %s27, 1
      %p196 = por %p194, %p195
      %p197 = scmp.ne.s32.totalorder %s186, %s187
      %p198 = scmp.eq.s32.totalorder %s27, 0
      %p199 = por %p197, %p198
      %p200 = scmp.ne.s32.totalorder %s186, %s187
      %p201 = scmp.eq.s32.totalorder %s28, 1
      %p202 = por %p200, %p201
      %p204 = scmp.ne.s32.totalorder %s187, %s203
      %p205 = scmp.eq.s32.totalorder %s28, 0
      %p206 = por %p204, %p205
      %p207 = scmp.le.s32.totalorder 1, %s22
      %p208 = scmp.lt.s32.totalorder %s22, 3
      %p209 = pnand %p207, %p208
      %p210 = pneg %p209
      // Predicated region
      $region9: #{tpu_custom_call.1} parent=5 // pred_check
        _
      $region10: #{tpu_custom_call.1} parent=5 // pred_check_branch
        %212 = sbr.rel (%p209) target = $region12
      $region11: #{tpu_custom_call.1} parent=5 // pred_region
        %s213 = ssub.s32 %s22, 1
        // Predicated region
        $region13: #{tpu_custom_call.1} parent=11 // pred_check
          %p214 = pneg %p69
        $region14: #{tpu_custom_call.1} parent=11 // pred_check_branch
          %216 = sbr.rel (%p214) target = $region16
        $region15: #{tpu_custom_call.1} parent=11 // pred_region
          _
        $region16: #{tpu_custom_call.1} parent=11 // pred_fallthru
          _
      $region12: #{tpu_custom_call.1} parent=5 // pred_fallthru
        _
      %p217 = scmp.lt.s32.totalorder %s22, 2
      // Predicated region
      $region17: #{tpu_custom_call.1} parent=5 // pred_check
        %p218 = pneg %p217
      $region18: #{tpu_custom_call.1} parent=5 // pred_check_branch
        %220 = sbr.rel (%p218) target = $region20
      $region19: #{tpu_custom_call.1} parent=5 // pred_region
        // Predicated region
        $region21: #{tpu_custom_call.1} parent=19 // pred_check
          %p221 = pneg %p42
        $region22: #{tpu_custom_call.1} parent=19 // pred_check_branch
          %223 = sbr.rel (%p221) target = $region24
        $region23: #{tpu_custom_call.1} parent=19 // pred_region
          %s224 = sand.u32 %s32, 1
          %s225 = scalar_lea.sflag [#allocation3], %s224
          %s226 = sand.u32 %s32, 1
          %s227 = smul.addr %s226, 8
          %s228 = scalar_lea.vmem [#allocation2], %s227
          %s230 = ssub.s32 128, 128
          %231 = vsyncadd %s225, %s230
          %s232 = smul.addr %s22, 128
          %s233 = scalar_lea.hbm %s0, %s232
          %s235 = sshll.u32 %s228, 4
          %s236 = int_to_ptr.vmem [resolvable:$true] %s235
          %238 = dma.hbm_to_vmem [thread:$0]  %s233, 128, %s236, %s225
        $region24: #{tpu_custom_call.1} parent=19 // pred_fallthru
          _
      $region20: #{tpu_custom_call.1} parent=5 // pred_fallthru
        _
      %p239 = scmp.le.s32.totalorder 1, %s22
      %p240 = scmp.lt.s32.totalorder %s22, 3
      %p241 = pnand %p239, %p240
      %p242 = pneg %p241
      // Predicated region
      $region25: #{tpu_custom_call.1} parent=5 // pred_check
        _
      $region26: #{tpu_custom_call.1} parent=5 // pred_check_branch
        %244 = sbr.rel (%p241) target = $region28
      $region27: #{tpu_custom_call.1} parent=5 // pred_region
        %s245 = ssub.s32 %s22, 1
        %s246 = sand.u32 %s35, 1
        %s247 = scalar_lea.sflag [#allocation3], %s246
        %s248 = sand.u32 %s35, 1
        %s249 = smul.addr %s248, 8
        %s250 = scalar_lea.vmem [#allocation2], %s249
        // Predicated region
        $region29: #{tpu_custom_call.1} parent=27 // pred_check
          %p251 = pneg %p48
        $region30: #{tpu_custom_call.1} parent=27 // pred_check_branch
          %253 = sbr.rel (%p251) target = $region32
        $region31: #{tpu_custom_call.1} parent=27 // pred_region
          %254 = dma.done %s247, 128
        $region32: #{tpu_custom_call.1} parent=27 // pred_fallthru
          _
        %s255 = sand.u32 %s35, 1
        %s256 = scalar_lea.sflag [#allocation3], %s255
        %s257 = sand.u32 %s35, 1
        %s258 = smul.addr %s257, 8
        %s259 = scalar_lea.vmem [#allocation2], %s258
        %p260 = pneg %p48
        %p261 = pneg %p45
        %p262 = pneg %p69
        %p263 = pneg %p66
        %p264 = pneg %p95
        %p265 = pneg %p92
        %s266 = sand.u32 %s82, 1
        %s267 = scalar_lea.sflag [#allocation4], %s266
        %s268 = sand.u32 %s82, 1
        %s269 = smul.addr %s268, 8
        %s270 = scalar_lea.vmem [#allocation5], %s269
        %p271 = pneg %p121
        %p272 = pneg %p118
        %p273 = scmp.lt.s32.totalorder %s27, 1
        %s274 = scalar_select %p273, %s27, 1
        %s275 = smul.addr %s274, 8
        %s276 = scalar_lea.vmem %s3, %s275
        %p277 = pneg %p147
        %p278 = pneg %p144
        %p279 = scmp.lt.s32.totalorder %s27, 1
        %s280 = scalar_select %p279, %s27, 1
        %s281 = smul.addr %s280, 8
        %s282 = scalar_lea.vmem %s4, %s281
        %p283 = pneg %p173
        %p284 = pneg %p170
        %s285 = sand.u32 %s27, 1
        %s286 = scalar_lea.sflag [#allocation7], %s285
        %s287 = sand.u32 %s160, 1
        %s288 = scalar_lea.vmem [#allocation6], %s287
        %p289 = pneg %p199
        %p290 = pneg %p196
        %s291 = sand.u32 %s27, 1
        %s292 = scalar_lea.sflag [#allocation7], %s291
        %s293 = sand.u32 %s186, 1
        %s294 = scalar_lea.vmem [#allocation8], %s293
        %p295 = scmp.lt.s32.totalorder %s27, 1
        %s296 = scalar_select %p295, %s27, 1
        %s297 = smul.addr %s296, 8
        %s298 = scalar_lea.vmem %s3, %s297
        %p299 = scmp.lt.s32.totalorder %s27, 1
        %s300 = scalar_select %p299, %s27, 1
        %s301 = smul.addr %s300, 8
        %s302 = scalar_lea.vmem %s4, %s301
        %v303 = vld [vmem:[%s250] sm:$0xff]
        %v304 = vld [vmem:[%s1] sm:$0x1]
        %v306 = vlaneseq
        %v307 = vshrl.u32 %v306, 7
        %v308 = vsub.s32 0, %v307
        %v309 = vrot.slane %v304, %v308
        %v311 = vadd.f32 %v303, %v309
        %v312 = vlaneseq
        %v313 = vand.u32 %v312, 127
        %vm314 = vcmask 261120
        %v315 = vsel %vm314, %v311, -inf
        %316 = vmax.xlane.f32.xlu0 %v315
        %v317 = vpop.xlane.xlu0 %316
        %vm318 = vcmp.eq.f32.partialorder %v311, %v317
        %v319 = vsel %vm318, %v313, 32
        %v320 = vsel %vm314, %v319, 2147483647
        %v321 = vand.u32 %v320, 65535
        %v322 = vshra.s32 %v320, 16
        %v323 = vcvt.s32.f32 %v321
        %v324 = vcvt.s32.f32 %v322
        %325 = vmin.xlane.f32.xlu0 %v324
        %v326 = vpop.xlane.xlu0 %325
        %vm327 = vcmp.eq.f32.partialorder %v324, %v326
        %v328 = vsel %vm327, %v323, inf
        %329 = vmin.xlane.f32.xlu0 %v328
        %v330 = vpop.xlane.xlu0 %329
        %v331 = vcvt.f32.s32 %v330
        %v332 = vcvt.f32.s32 %v326
        %v333 = vshll.u32 %v332, 16
        %v334 = vadd.s32 %v333, %v331
        %vm335 = vcmp.eq.s32.totalorder %v313, %v334
        %v336 = vsel %vm335, 1, 0
        %v337 = vcvt.s32.f32 %v336
        %v338 = vsub.f32 %v311, %v317
        %v339 = vmul.f32 %v338, 1.442695
        %v340 = vpow.pop %v339
        %v341 = vsel %vm314, %v340, 0.0
        %342 = vadd.xlane.f32.xlu0 %v341
        %v343 = vpop.xlane.xlu0 %342
        %v344 = vrcp.pop %v343
        %v345 = vmul.f32 %v340, %v344
        %v346 = vlog2.pop %v343
        %v347 = vmul.f32 %v346, 0.6931472
        %v348 = vmul.f32 %v345, %v338
        %v349 = vsel %vm314, %v348, 0.0
        %350 = vadd.xlane.f32.xlu0 %v349
        %v351 = vpop.xlane.xlu0 %350
        %v352 = vsub.f32 %v347, %v351
        %353 = vst.msk [vmem:[%s270] sm:$0xff] %vm314, %v337
        %vm354 = vcmask 7168
        %355 = vst.msk [vmem:[%s298] sm:$0xff] %vm354, %v352
        %356 = vst.msk [vmem:[%s302] sm:$0xff] %vm354, %v334
        %v357 = vsel %vm314, %v345, 0.0
        %v358 = vrot.slane %v357, 4
        %v359 = vadd.f32 %v357, %v358
        %v360 = vrot.slane %v359, 2
        %v361 = vadd.f32 %v359, %v360
        %v362 = vrot.slane %v361, 1
        %v363 = vadd.f32 %v361, %v362
        %v364 = vsel %vm314, %v337, 0.0
        %v365 = vrot.slane %v364, 4
        %v366 = vadd.f32 %v364, %v365
        %v367 = vrot.slane %v366, 2
        %v368 = vadd.f32 %v366, %v367
        %v369 = vrot.slane %v368, 1
        %v370 = vadd.f32 %v368, %v369
        %vm371 = vcmask 253952
        %372 = vst.msk [vmem:[%s288] sm:$0x1] %vm371, %v363
        %373 = vst.msk [vmem:[%s294] sm:$0x1] %vm371, %v370
        %s374 = sand.u32 %s82, 1
        %s375 = scalar_lea.sflag [#allocation4], %s374
        %s376 = sand.u32 %s82, 1
        %s377 = smul.addr %s376, 8
        %s378 = scalar_lea.vmem [#allocation5], %s377
        %p379 = scmp.lt.s32.totalorder %s27, 1
        %s380 = scalar_select %p379, %s27, 1
        %s381 = smul.addr %s380, 8
        %s382 = scalar_lea.vmem %s3, %s381
        %p383 = scmp.lt.s32.totalorder %s27, 1
        %s384 = scalar_select %p383, %s27, 1
        %s385 = smul.addr %s384, 8
        %s386 = scalar_lea.vmem %s4, %s385
        %s387 = sand.u32 %s27, 1
        %s388 = scalar_lea.sflag [#allocation7], %s387
        %s389 = sand.u32 %s160, 1
        %s390 = scalar_lea.vmem [#allocation6], %s389
        %s391 = sand.u32 %s27, 1
        %s392 = scalar_lea.sflag [#allocation7], %s391
        %s393 = sand.u32 %s186, 1
        %s394 = scalar_lea.vmem [#allocation8], %s393
        // Predicated region
        $region33: #{tpu_custom_call.1} parent=27 // pred_check
          %p395 = pneg %p92
        $region34: #{tpu_custom_call.1} parent=27 // pred_check_branch
          %397 = sbr.rel (%p395) target = $region36
        $region35: #{tpu_custom_call.1} parent=27 // pred_region
          %s399 = ssub.s32 128, 128
          %400 = vsyncadd %s375, %s399
          %s401 = smul.addr %s27, 128
          %s402 = scalar_lea.hbm %s2, %s401
          %s404 = sshll.u32 %s378, 4
          %s405 = int_to_ptr.vmem [resolvable:$true] %s404
          %407 = dma.vmem_to_hbm [thread:$0]  %s405, 128, %s402, %s375
        $region36: #{tpu_custom_call.1} parent=27 // pred_fallthru
          _
        // Predicated region
        $region37: #{tpu_custom_call.1} parent=27 // pred_check
          %p408 = pneg %p118
        $region38: #{tpu_custom_call.1} parent=27 // pred_check_branch
          %410 = sbr.rel (%p408) target = $region40
        $region39: #{tpu_custom_call.1} parent=27 // pred_region
          _
        $region40: #{tpu_custom_call.1} parent=27 // pred_fallthru
          _
        // Predicated region
        $region41: #{tpu_custom_call.1} parent=27 // pred_check
          %p411 = pneg %p144
        $region42: #{tpu_custom_call.1} parent=27 // pred_check_branch
          %413 = sbr.rel (%p411) target = $region44
        $region43: #{tpu_custom_call.1} parent=27 // pred_region
          _
        $region44: #{tpu_custom_call.1} parent=27 // pred_fallthru
          _
        // Predicated region
        $region45: #{tpu_custom_call.1} parent=27 // pred_check
          %p414 = pneg %p170
        $region46: #{tpu_custom_call.1} parent=27 // pred_check_branch
          %416 = sbr.rel (%p414) target = $region48
        $region47: #{tpu_custom_call.1} parent=27 // pred_region
          %s418 = ssub.s32 16, 16
          %419 = vsyncadd %s388, %s418
          %s420 = smul.addr %s27, 16
          %s421 = scalar_lea.hbm %s5, %s420
          %s423 = sshll.u32 %s390, 4
          %s424 = int_to_ptr.vmem [resolvable:$true] %s423
          %426 = dma.vmem_to_hbm [thread:$0]  %s424, 16, %s421, %s388
        $region48: #{tpu_custom_call.1} parent=27 // pred_fallthru
          _
        // Predicated region
        $region49: #{tpu_custom_call.1} parent=27 // pred_check
          %p427 = pneg %p196
        $region50: #{tpu_custom_call.1} parent=27 // pred_check_branch
          %429 = sbr.rel (%p427) target = $region52
        $region51: #{tpu_custom_call.1} parent=27 // pred_region
          %s431 = ssub.s32 16, 16
          %432 = vsyncadd %s392, %s431
          %s433 = smul.addr %s27, 16
          %s434 = scalar_lea.hbm %s6, %s433
          %s436 = sshll.u32 %s394, 4
          %s437 = int_to_ptr.vmem [resolvable:$true] %s436
          %439 = dma.vmem_to_hbm [thread:$0]  %s437, 16, %s434, %s392
        $region52: #{tpu_custom_call.1} parent=27 // pred_fallthru
          _
      $region28: #{tpu_custom_call.1} parent=5 // pred_fallthru
        _
      %p440 = scmp.le.s32.totalorder 2, %s22
      // Predicated region
      $region53: #{tpu_custom_call.1} parent=5 // pred_check
        %p441 = pneg %p440
      $region54: #{tpu_custom_call.1} parent=5 // pred_check_branch
        %443 = sbr.rel (%p441) target = $region56
      $region55: #{tpu_custom_call.1} parent=5 // pred_region
        %s444 = ssub.s32 %s22, 2
        // Predicated region
        $region57: #{tpu_custom_call.1} parent=55 // pred_check
          %p445 = pneg %p98
        $region58: #{tpu_custom_call.1} parent=55 // pred_check_branch
          %447 = sbr.rel (%p445) target = $region60
        $region59: #{tpu_custom_call.1} parent=55 // pred_region
          %s448 = sand.u32 %s83, 1
          %s449 = scalar_lea.sflag [#allocation4], %s448
          %s450 = sand.u32 %s83, 1
          %s451 = smul.addr %s450, 8
          %s452 = scalar_lea.vmem [#allocation5], %s451
          %453 = dma.done %s449, 128
        $region60: #{tpu_custom_call.1} parent=55 // pred_fallthru
          _
        // Predicated region
        $region61: #{tpu_custom_call.1} parent=55 // pred_check
          %p454 = pneg %p124
        $region62: #{tpu_custom_call.1} parent=55 // pred_check_branch
          %456 = sbr.rel (%p454) target = $region64
        $region63: #{tpu_custom_call.1} parent=55 // pred_region
          %p457 = scmp.lt.s32.totalorder %s28, 1
          %s458 = scalar_select %p457, %s28, 1
          %s459 = smul.addr %s458, 8
          %s460 = scalar_lea.vmem %s3, %s459
        $region64: #{tpu_custom_call.1} parent=55 // pred_fallthru
          _
        // Predicated region
        $region65: #{tpu_custom_call.1} parent=55 // pred_check
          %p461 = pneg %p150
        $region66: #{tpu_custom_call.1} parent=55 // pred_check_branch
          %463 = sbr.rel (%p461) target = $region68
        $region67: #{tpu_custom_call.1} parent=55 // pred_region
          %p464 = scmp.lt.s32.totalorder %s28, 1
          %s465 = scalar_select %p464, %s28, 1
          %s466 = smul.addr %s465, 8
          %s467 = scalar_lea.vmem %s4, %s466
        $region68: #{tpu_custom_call.1} parent=55 // pred_fallthru
          _
        // Predicated region
        $region69: #{tpu_custom_call.1} parent=55 // pred_check
          %p468 = pneg %p176
        $region70: #{tpu_custom_call.1} parent=55 // pred_check_branch
          %470 = sbr.rel (%p468) target = $region72
        $region71: #{tpu_custom_call.1} parent=55 // pred_region
          %s471 = sand.u32 %s28, 1
          %s472 = scalar_lea.sflag [#allocation7], %s471
          %s473 = sand.u32 %s161, 1
          %s474 = scalar_lea.vmem [#allocation6], %s473
          %475 = dma.done %s472, 16
        $region72: #{tpu_custom_call.1} parent=55 // pred_fallthru
          _
        // Predicated region
        $region73: #{tpu_custom_call.1} parent=55 // pred_check
          %p476 = pneg %p202
        $region74: #{tpu_custom_call.1} parent=55 // pred_check_branch
          %478 = sbr.rel (%p476) target = $region76
        $region75: #{tpu_custom_call.1} parent=55 // pred_region
          %s479 = sand.u32 %s28, 1
          %s480 = scalar_lea.sflag [#allocation7], %s479
          %s481 = sand.u32 %s187, 1
          %s482 = scalar_lea.vmem [#allocation8], %s481
          %483 = dma.done %s480, 16
        $region76: #{tpu_custom_call.1} parent=55 // pred_fallthru
          _
      $region56: #{tpu_custom_call.1} parent=5 // pred_fallthru
        _
    $region6: #{tpu_custom_call.1} parent=1 // loop_footer
      %s26 = sadd.s32 1, %s22
    $region7: #{tpu_custom_call.1} parent=1 // loop_footer_branch
      %21 = sbr.rel target = $region3
    $region8: #{tpu_custom_call.1} parent=1 // loop_exit
      _
    %484 = vsyncpa [#allocation3], 1
    %s485 = scalar_lea.sflag [#allocation3], 1
    %486 = vsyncpa %s485, 1
    %487 = vsyncpa [#allocation4], 1
    %s488 = scalar_lea.sflag [#allocation4], 1
    %489 = vsyncpa %s488, 1
    %490 = vsyncpa [#allocation7], 1
    %s491 = scalar_lea.sflag [#allocation7], 1
    %492 = vsyncpa %s491, 1

</llo_original>
